<compile_context>
chip_gen: v5e
topology: v5e:2x2
jax: 0.10.0
libtpu: 0.0.40
codegen_flags: <defaults>
</compile_context>

<pallas_src>
import jax
import jax.numpy as jnp
from jax.experimental import pallas as pl
from jax.experimental.pallas import tpu as pltpu

# Logical layer sizes from the PyTorch module.
D_IN, D_H1, D_H2, D_OUT = 150, 150, 75, 4
# Lane-aligned (multiple-of-128) feature widths presented to the MXU.
P_H1, P_H2, P_OUT = 256, 128, 128

MAX_BATCH_TILE = 2048   # rows per grid step


def _round_up(n, m):
    return (n + m - 1) // m * m


def _mlp_kernel(x_ref, w1_ref, b1_ref, w2_ref, b2_ref, w3_ref, b3_ref, o_ref):
    # x arrives as f32 (TB, 150); cast to bf16 in-kernel (no extra HBM pass).
    x = x_ref[...].astype(jnp.bfloat16)                               # (TB, 150)

    h1 = jnp.dot(x, w1_ref[...], preferred_element_type=jnp.float32)
    h1 = jnp.maximum(h1 + b1_ref[...], 0.0)                           # (TB, 256) f32

    h2 = jnp.dot(h1.astype(jnp.bfloat16), w2_ref[...],
                 preferred_element_type=jnp.float32)
    h2 = jnp.maximum(h2 + b2_ref[...], 0.0)                           # (TB, 128) f32

    h3 = jnp.dot(h2.astype(jnp.bfloat16), w3_ref[...],
                 preferred_element_type=jnp.float32)
    h3 = jnp.maximum(h3 + b3_ref[...], 0.0)                           # (TB, 128) f32

    # Lane-dense bf16 store (half the writeback of f32); wrapper slices cols 0:4.
    o_ref[...] = h3.astype(o_ref.dtype)


def prepare_params(params):
    """One-time: zero-pad out-feature dims to lane multiples; weights -> bf16,
    biases -> f32. Padded bias columns are zero, so ReLU(0 + 0) = 0 and padded
    lanes never leak into downstream layers. w1 keeps its 150-row contraction dim
    so x needs no K-padding."""
    def pad2(a, rows, cols):
        return jnp.pad(a, ((0, rows - a.shape[0]), (0, cols - a.shape[1])))

    w1 = pad2(params["w1"], D_IN, P_H1).astype(jnp.bfloat16)    # (150, 256)
    b1 = pad2(params["b1"], 1, P_H1).astype(jnp.float32)
    w2 = pad2(params["w2"], P_H1, P_H2).astype(jnp.bfloat16)    # (256, 128)
    b2 = pad2(params["b2"], 1, P_H2).astype(jnp.float32)
    w3 = pad2(params["w3"], P_H2, P_OUT).astype(jnp.bfloat16)   # (128, 128)
    b3 = pad2(params["b3"], 1, P_OUT).astype(jnp.float32)
    return (w1, b1, w2, b2, w3, b3)


def _tile_plan(B):
    """Pick (batch tile, grid steps). Single full block for small B; otherwise an
    even number of tiles (>=2, so v7x's two TensorCores both get work), tile size a
    multiple of 16 and capped at MAX_BATCH_TILE. Partial last blocks are handled by
    Pallas's masked loads/stores, so no batch padding is needed."""
    if B <= 256:
        return B, 1   # block == full array dims -> always a legal BlockSpec
    num_tiles = max(2, pl.cdiv(B, MAX_BATCH_TILE))
    if num_tiles % 2:
        num_tiles += 1
    tb = _round_up(pl.cdiv(B, num_tiles), 16)
    return tb, pl.cdiv(B, tb)


@jax.jit
def net_forward(x, prepared):
    """x: (B, 150) float32. prepared: output of prepare_params()."""
    w1, b1, w2, b2, w3, b3 = prepared
    B = x.shape[0]
    TB, grid_b = _tile_plan(B)

    rows = TB * grid_b
    flops = 2 * rows * (D_IN * P_H1 + P_H1 * P_H2 + P_H2 * P_OUT)
    bytes_accessed = (
        B * D_IN * 4                                   # x read (f32, unpadded)
        + (w1.size + w2.size + w3.size) * 2            # bf16 weights
        + (b1.size + b2.size + b3.size) * 4            # f32 biases
        + B * P_OUT * 2                                # bf16 output write
    )

    out = pl.pallas_call(
        _mlp_kernel,
        out_shape=jax.ShapeDtypeStruct((B, P_OUT), jnp.bfloat16),
        grid=(grid_b,),
        in_specs=[
            pl.BlockSpec((TB, D_IN), lambda i: (i, 0)),      # x: tiled over batch
            pl.BlockSpec((D_IN, P_H1), lambda i: (0, 0)),    # weights: VMEM-resident
            pl.BlockSpec((1, P_H1), lambda i: (0, 0)),
            pl.BlockSpec((P_H1, P_H2), lambda i: (0, 0)),
            pl.BlockSpec((1, P_H2), lambda i: (0, 0)),
            pl.BlockSpec((P_H2, P_OUT), lambda i: (0, 0)),
            pl.BlockSpec((1, P_OUT), lambda i: (0, 0)),
        ],
        out_specs=pl.BlockSpec((TB, P_OUT), lambda i: (i, 0)),
        compiler_params=pltpu.CompilerParams(
            dimension_semantics=("parallel",),               # shards across v7x's 2 TCs
            vmem_limit_bytes=48 * 1024 * 1024),
        cost_estimate=pl.CostEstimate(
            flops=flops, transcendentals=0, bytes_accessed=bytes_accessed),
    )(x, w1, b1, w2, b2, w3, b3)

    return out[:, :D_OUT].astype(jnp.float32)


def init_params(key):
    """Deterministic init matching the PyTorch module's shapes.
    PyTorch nn.Linear(in, out) has weight (out, in); we store (in, out)."""
    ks = jax.random.split(key, 6)

    def linear(kw, kb, fan_in, fan_out):
        bound = 1.0 / jnp.sqrt(fan_in)
        w = jax.random.uniform(kw, (fan_in, fan_out), jnp.float32, -bound, bound)
        b = jax.random.uniform(kb, (1, fan_out), jnp.float32, -bound, bound)
        return w, b

    w1, b1 = linear(ks[0], ks[1], D_IN, D_H1)
    w2, b2 = linear(ks[2], ks[3], D_H1, D_H2)
    w3, b3 = linear(ks[4], ks[5], D_H2, D_OUT)
    return {"w1": w1, "b1": b1, "w2": w2, "b2": b2, "w3": w3, "b3": b3}


def _reference(x, p, dtype=jnp.float32, out_dtype=None):
    """relu((relu((relu(x@w1+b1))@w2+b2))@w3+b3); optionally mirrors the kernel's
    bf16 operands / bf16 output store."""
    def layer(h, w, b):
        y = jnp.dot(h.astype(dtype), w.astype(dtype),
                    preferred_element_type=jnp.float32) + b
        return jnp.maximum(y, 0.0)

    h = layer(x, p["w1"], p["b1"])
    h = layer(h, p["w2"], p["b2"])
    h = layer(h, p["w3"], p["b3"])
    if out_dtype is not None:
        h = h.astype(out_dtype).astype(jnp.float32)
    return h


if __name__ == "__main__":
    key = jax.random.PRNGKey(0)
    kp, kx = jax.random.split(key)
    params = init_params(kp)
    prepared = prepare_params(params)   # pad + cast once, reused across calls

    # B=8: single-tile path.  B=384: multi-tile path (TB=192, grid=(2,), "parallel").
    for B in (8, 384):
        x = jax.random.normal(jax.random.fold_in(kx, B), (B, D_IN), jnp.float32)
        out = jax.block_until_ready(net_forward(x, prepared))
        assert out.shape == (B, D_OUT)

        # Tight check vs. a reference that mirrors the kernel numerics
        # (bf16 operands, f32 accumulation, bf16 output store).
        ref_bf16 = _reference(x, params, dtype=jnp.bfloat16, out_dtype=jnp.bfloat16)
        assert jnp.allclose(out, ref_bf16, atol=1e-2, rtol=1e-2), \
            f"mismatch vs bf16 reference at B={B}"

        # Loose sanity check vs. the pure-f32 PyTorch-equivalent forward.
        ref_f32 = _reference(x, params, dtype=jnp.float32)
        assert jnp.allclose(out, ref_f32, atol=5e-2, rtol=5e-2), \
            f"mismatch vs f32 reference at B={B}"

    print("KERNEL_OK")
</pallas_src>

<mosaic_0001>
module attributes {stable_mosaic.version = 11 : i64} {
  func.func @_mlp_kernel(%arg0: i32, %arg1: memref<8x150xf32, #tpu.memory_space<vmem>>, %arg2: memref<150x256xbf16, #tpu.memory_space<vmem>>, %arg3: memref<1x256xf32, #tpu.memory_space<vmem>>, %arg4: memref<256x128xbf16, #tpu.memory_space<vmem>>, %arg5: memref<1x128xf32, #tpu.memory_space<vmem>>, %arg6: memref<128x128xbf16, #tpu.memory_space<vmem>>, %arg7: memref<1x128xf32, #tpu.memory_space<vmem>>, %arg8: memref<8x128xbf16, #tpu.memory_space<vmem>>) attributes {dimension_semantics = [#tpu.dimension_semantics<parallel>], iteration_bounds = array<i64: 1>, scalar_prefetch = 0 : i64, scratch_operands = 0 : i64, tpu.core_type = #tpu.core_type<tc>, window_params = [{transform_indices = @transform_0, window_bounds = array<i64: 8, 150>}, {pipeline_mode = #tpu.pipeline_mode<synchronous>, transform_indices = @transform_1, window_bounds = array<i64: 150, 256>}, {pipeline_mode = #tpu.pipeline_mode<synchronous>, transform_indices = @transform_2, window_bounds = array<i64: 1, 256>}, {pipeline_mode = #tpu.pipeline_mode<synchronous>, transform_indices = @transform_3, window_bounds = array<i64: 256, 128>}, {pipeline_mode = #tpu.pipeline_mode<synchronous>, transform_indices = @transform_4, window_bounds = array<i64: 1, 128>}, {pipeline_mode = #tpu.pipeline_mode<synchronous>, transform_indices = @transform_5, window_bounds = array<i64: 128, 128>}, {pipeline_mode = #tpu.pipeline_mode<synchronous>, transform_indices = @transform_6, window_bounds = array<i64: 1, 128>}, {transform_indices = @transform_7, window_bounds = array<i64: 8, 128>}]} {
    %c0 = arith.constant 0 : index
    %c0_0 = arith.constant 0 : index
    %0 = vector.load %arg1[%c0, %c0_0] : memref<8x150xf32, #tpu.memory_space<vmem>>, vector<8x150xf32>
    %1 = arith.truncf %0 : vector<8x150xf32> to vector<8x150xbf16>
    %c0_1 = arith.constant 0 : index
    %c0_2 = arith.constant 0 : index
    %2 = vector.load %arg2[%c0_1, %c0_2] : memref<150x256xbf16, #tpu.memory_space<vmem>>, vector<150x256xbf16>
    %cst = arith.constant dense<0.000000e+00> : vector<8x256xf32>
    %3 = tpu.matmul %1, %2, %cst {dimension_numbers = #tpu.dot_dimension_numbers<[1], [0], [0], [1], [0, 0, 1, 1], [], []>} : vector<8x150xbf16>, vector<150x256xbf16>, vector<8x256xf32> -> vector<8x256xf32>
    %c0_3 = arith.constant 0 : index
    %c0_4 = arith.constant 0 : index
    %4 = vector.load %arg3[%c0_3, %c0_4] : memref<1x256xf32, #tpu.memory_space<vmem>>, vector<1x256xf32>
    %5 = vector.broadcast %4 : vector<1x256xf32> to vector<8x256xf32>
    %6 = arith.addf %3, %5 : vector<8x256xf32>
    %cst_5 = arith.constant 0.000000e+00 : f32
    %7 = vector.broadcast %cst_5 : f32 to vector<8x256xf32>
    %8 = arith.maximumf %6, %7 : vector<8x256xf32>
    %9 = arith.truncf %8 : vector<8x256xf32> to vector<8x256xbf16>
    %c0_6 = arith.constant 0 : index
    %c0_7 = arith.constant 0 : index
    %10 = vector.load %arg4[%c0_6, %c0_7] : memref<256x128xbf16, #tpu.memory_space<vmem>>, vector<256x128xbf16>
    %cst_8 = arith.constant dense<0.000000e+00> : vector<8x128xf32>
    %11 = tpu.matmul %9, %10, %cst_8 {dimension_numbers = #tpu.dot_dimension_numbers<[1], [0], [0], [1], [0, 0, 1, 1], [], []>} : vector<8x256xbf16>, vector<256x128xbf16>, vector<8x128xf32> -> vector<8x128xf32>
    %c0_9 = arith.constant 0 : index
    %c0_10 = arith.constant 0 : index
    %12 = vector.load %arg5[%c0_9, %c0_10] : memref<1x128xf32, #tpu.memory_space<vmem>>, vector<1x128xf32>
    %13 = vector.broadcast %12 : vector<1x128xf32> to vector<8x128xf32>
    %14 = arith.addf %11, %13 : vector<8x128xf32>
    %cst_11 = arith.constant 0.000000e+00 : f32
    %15 = vector.broadcast %cst_11 : f32 to vector<8x128xf32>
    %16 = arith.maximumf %14, %15 : vector<8x128xf32>
    %17 = arith.truncf %16 : vector<8x128xf32> to vector<8x128xbf16>
    %c0_12 = arith.constant 0 : index
    %c0_13 = arith.constant 0 : index
    %18 = vector.load %arg6[%c0_12, %c0_13] : memref<128x128xbf16, #tpu.memory_space<vmem>>, vector<128x128xbf16>
    %cst_14 = arith.constant dense<0.000000e+00> : vector<8x128xf32>
    %19 = tpu.matmul %17, %18, %cst_14 {dimension_numbers = #tpu.dot_dimension_numbers<[1], [0], [0], [1], [0, 0, 1, 1], [], []>} : vector<8x128xbf16>, vector<128x128xbf16>, vector<8x128xf32> -> vector<8x128xf32>
    %c0_15 = arith.constant 0 : index
    %c0_16 = arith.constant 0 : index
    %20 = vector.load %arg7[%c0_15, %c0_16] : memref<1x128xf32, #tpu.memory_space<vmem>>, vector<1x128xf32>
    %21 = vector.broadcast %20 : vector<1x128xf32> to vector<8x128xf32>
    %22 = arith.addf %19, %21 : vector<8x128xf32>
    %cst_17 = arith.constant 0.000000e+00 : f32
    %23 = vector.broadcast %cst_17 : f32 to vector<8x128xf32>
    %24 = arith.maximumf %22, %23 : vector<8x128xf32>
    %25 = arith.truncf %24 : vector<8x128xf32> to vector<8x128xbf16>
    %c0_18 = arith.constant 0 : index
    %c0_19 = arith.constant 0 : index
    %26 = vector.load %arg8[%c0_18, %c0_19] : memref<8x128xbf16, #tpu.memory_space<vmem>>, vector<8x128xbf16>
    tpu.vector_store %arg8[%c0_18, %c0_19], %25 {strides = array<i32>} : memref<8x128xbf16, #tpu.memory_space<vmem>>, vector<8x128xbf16>,
    return
  }
  func.func @transform_0(%arg0: i32) -> (i32, i32) {
    %c0_i32 = arith.constant 0 : i32
    %c0_i32_0 = arith.constant 0 : i32
    return %arg0, %c0_i32 : i32, i32
  }
  func.func @transform_1(%arg0: i32) -> (i32, i32) {
    %c0_i32 = arith.constant 0 : i32
    %c0_i32_0 = arith.constant 0 : i32
    %c0_i32_1 = arith.constant 0 : i32
    return %c0_i32, %c0_i32_0 : i32, i32
  }
  func.func @transform_2(%arg0: i32) -> (i32, i32) {
    %c0_i32 = arith.constant 0 : i32
    %c0_i32_0 = arith.constant 0 : i32
    %c0_i32_1 = arith.constant 0 : i32
    return %c0_i32, %c0_i32_0 : i32, i32
  }
  func.func @transform_3(%arg0: i32) -> (i32, i32) {
    %c0_i32 = arith.constant 0 : i32
    %c0_i32_0 = arith.constant 0 : i32
    %c0_i32_1 = arith.constant 0 : i32
    return %c0_i32, %c0_i32_0 : i32, i32
  }
  func.func @transform_4(%arg0: i32) -> (i32, i32) {
    %c0_i32 = arith.constant 0 : i32
    %c0_i32_0 = arith.constant 0 : i32
    %c0_i32_1 = arith.constant 0 : i32
    return %c0_i32, %c0_i32_0 : i32, i32
  }
  func.func @transform_5(%arg0: i32) -> (i32, i32) {
    %c0_i32 = arith.constant 0 : i32
    %c0_i32_0 = arith.constant 0 : i32
    %c0_i32_1 = arith.constant 0 : i32
    return %c0_i32, %c0_i32_0 : i32, i32
  }
  func.func @transform_6(%arg0: i32) -> (i32, i32) {
    %c0_i32 = arith.constant 0 : i32
    %c0_i32_0 = arith.constant 0 : i32
    %c0_i32_1 = arith.constant 0 : i32
    return %c0_i32, %c0_i32_0 : i32, i32
  }
  func.func @transform_7(%arg0: i32) -> (i32, i32) {
    %c0_i32 = arith.constant 0 : i32
    %c0_i32_0 = arith.constant 0 : i32
    return %arg0, %c0_i32 : i32, i32
  }
}

</mosaic_0001>

<llo_original>
// kernel: net_forward.1
$region0: #{net_forward.1}
  #allocation0 [shape = 'u32[]', space=smem, size = 0x4, offset = 0x4, fixed_abs, tag = 'smem constant byte address 0x4 - core index']
  #allocation1 [shape = 'u32[72,128]{1,0:T(1,128)}', space=vmem, size = 0x9000, scoped, tag = 'internal scratch']
  %s0 = inlined_call_operand.hbm [shape: f32[8,150], index: 0, kind: input, shape index: {}]
  %s1 = inlined_call_operand.hbm [shape: bf16[150,256], index: 1, kind: input, shape index: {}]
  %s2 = inlined_call_operand.hbm [shape: f32[1,256], index: 2, kind: input, shape index: {}]
  %s3 = inlined_call_operand.hbm [shape: bf16[256,128], index: 3, kind: input, shape index: {}]
  %s4 = inlined_call_operand.vmem [shape: f32[1,128], index: 4, kind: input, shape index: {}]
  %s5 = inlined_call_operand.hbm [shape: bf16[128,128], index: 5, kind: input, shape index: {}]
  %s6 = inlined_call_operand.vmem [shape: f32[1,128], index: 6, kind: input, shape index: {}]
  %s7 = inlined_call_operand.vmem [shape: bf16[8,128], index: 7, kind: output, shape index: {}]
  %s8 = sld [smem:[#allocation0]]
  $region58: #{net_forward.1} parent=0
    _
  %s10 = ssub.s32 1, %s8
  %s11 = scalar_select 0, %s10, %s8
  $region1: #{net_forward.1} parent=0
    #allocation2 [shape = 'u8[8192]{0}', space=vmem, size = 0x2000, scoped, tag = 'input window, operand 0, single buffered']
    #allocation3 [shape = 's32[1]{0}', space=sflag, size = 0x4, scoped, tag = 'scoped memory for net_forward.1']
    #allocation4 [shape = 'u8[77824]{0}', space=vmem, size = 0x13000, scoped, tag = 'input window, operand 1, single buffered']
    #allocation5 [shape = 's32[1]{0}', space=sflag, size = 0x4, scoped, tag = 'scoped memory for net_forward.1']
    #allocation6 [shape = 'u8[1024]{0}', space=vmem, size = 0x400, scoped, tag = 'input window, operand 2, single buffered']
    #allocation7 [shape = 'u8[65536]{0}', space=vmem, size = 0x10000, scoped, tag = 'input window, operand 3, single buffered']
    #allocation8 [shape = 's32[1]{0}', space=sflag, size = 0x4, scoped, tag = 'scoped memory for net_forward.1']
    #allocation9 [shape = 'u8[32768]{0}', space=vmem, size = 0x8000, scoped, tag = 'input window, operand 5, single buffered']
    %12 = vsyncpa [#allocation3], 0
    %13 = vsyncpa [#allocation5], 0
    %14 = vsyncpa [#allocation8], 0
    // Predicated region
    $region2: #{net_forward.1} parent=1 // pred_check
      _
    $region3: #{net_forward.1} parent=1 // pred_check_branch
      %16 = sbr.rel (0) target = $region5
    $region4: #{net_forward.1} parent=1 // pred_region
      %18 = vsyncadd [#allocation3], 0
      %s20 = sshll.u32 %s0, 4
      %s21 = int_to_ptr.hbm [resolvable:$true] %s20
      %s22 = sshll.u32 [#allocation2], 4
      %s23 = int_to_ptr.vmem [resolvable:$true] %s22
      %25 = dma.hbm_to_vmem [thread:$0]  %s21, 256, %s23, [#allocation3]
    $region5: #{net_forward.1} parent=1 // pred_fallthru
      _
    // Predicated region
    $region6: #{net_forward.1} parent=1 // pred_check
      _
    $region7: #{net_forward.1} parent=1 // pred_check_branch
      %27 = sbr.rel (0) target = $region9
    $region8: #{net_forward.1} parent=1 // pred_region
      %29 = vsyncadd [#allocation5], 0
      %s30 = sshll.u32 %s1, 4
      %s31 = int_to_ptr.hbm [resolvable:$true] %s30
      %s32 = sshll.u32 [#allocation4], 4
      %s33 = int_to_ptr.vmem [resolvable:$true] %s32
      %38 = dma.hbm_to_vmem [thread:$0]  %s31, 2432, %s33, [#allocation5], 128, 128, 8
    $region9: #{net_forward.1} parent=1 // pred_fallthru
      _
    // Predicated region
    $region10: #{net_forward.1} parent=1 // pred_check
      _
    $region11: #{net_forward.1} parent=1 // pred_check_branch
      %40 = sbr.rel (0) target = $region13
    $region12: #{net_forward.1} parent=1 // pred_region
      %42 = vsyncadd [#allocation5], 0
      %s44 = sshll.u32 %s2, 4
      %s45 = int_to_ptr.hbm [resolvable:$true] %s44
      %s46 = sshll.u32 [#allocation6], 4
      %s47 = int_to_ptr.vmem [resolvable:$true] %s46
      %49 = dma.hbm_to_vmem [thread:$0]  %s45, 32, %s47, [#allocation5]
    $region13: #{net_forward.1} parent=1 // pred_fallthru
      _
    // Predicated region
    $region14: #{net_forward.1} parent=1 // pred_check
      _
    $region15: #{net_forward.1} parent=1 // pred_check_branch
      %51 = sbr.rel (0) target = $region17
    $region16: #{net_forward.1} parent=1 // pred_region
      %53 = vsyncadd [#allocation8], 0
      %s54 = sshll.u32 %s3, 4
      %s55 = int_to_ptr.hbm [resolvable:$true] %s54
      %s56 = sshll.u32 [#allocation7], 4
      %s57 = int_to_ptr.vmem [resolvable:$true] %s56
      %62 = dma.hbm_to_vmem [thread:$0]  %s55, 2048, %s57, [#allocation8], 64, 64, 4
    $region17: #{net_forward.1} parent=1 // pred_fallthru
      _
    // Predicated region
    $region18: #{net_forward.1} parent=1 // pred_check
      _
    $region19: #{net_forward.1} parent=1 // pred_check_branch
      %64 = sbr.rel (0) target = $region21
    $region20: #{net_forward.1} parent=1 // pred_region
      _
    $region21: #{net_forward.1} parent=1 // pred_fallthru
      _
    // Predicated region
    $region22: #{net_forward.1} parent=1 // pred_check
      _
    $region23: #{net_forward.1} parent=1 // pred_check_branch
      %66 = sbr.rel (0) target = $region25
    $region24: #{net_forward.1} parent=1 // pred_region
      %68 = vsyncadd [#allocation8], 0
      %s69 = sshll.u32 %s5, 4
      %s70 = int_to_ptr.hbm [resolvable:$true] %s69
      %s71 = sshll.u32 [#allocation9], 4
      %s72 = int_to_ptr.vmem [resolvable:$true] %s71
      %77 = dma.hbm_to_vmem [thread:$0]  %s70, 1024, %s72, [#allocation8], 64, 64, 4
    $region25: #{net_forward.1} parent=1 // pred_fallthru
      _
    // Predicated region
    $region26: #{net_forward.1} parent=1 // pred_check
      _
    $region27: #{net_forward.1} parent=1 // pred_check_branch
      %79 = sbr.rel (0) target = $region29
    $region28: #{net_forward.1} parent=1 // pred_region
      _
    $region29: #{net_forward.1} parent=1 // pred_fallthru
      _
    // Predicated region
    $region30: #{net_forward.1} parent=1 // pred_check
      _
    $region31: #{net_forward.1} parent=1 // pred_check_branch
      %81 = sbr.rel (0) target = $region33
    $region32: #{net_forward.1} parent=1 // pred_region
      %83 = dma.done [#allocation3], 256
    $region33: #{net_forward.1} parent=1 // pred_fallthru
      _
    // Predicated region
    $region34: #{net_forward.1} parent=1 // pred_check
      _
    $region35: #{net_forward.1} parent=1 // pred_check_branch
      %85 = sbr.rel (0) target = $region37
    $region36: #{net_forward.1} parent=1 // pred_region
      %87 = dma.done [#allocation5], 2432
    $region37: #{net_forward.1} parent=1 // pred_fallthru
      _
    // Predicated region
    $region38: #{net_forward.1} parent=1 // pred_check
      _
    $region39: #{net_forward.1} parent=1 // pred_check_branch
      %89 = sbr.rel (0) target = $region41
    $region40: #{net_forward.1} parent=1 // pred_region
      %91 = dma.done [#allocation5], 32
    $region41: #{net_forward.1} parent=1 // pred_fallthru
      _
    // Predicated region
    $region42: #{net_forward.1} parent=1 // pred_check
      _
    $region43: #{net_forward.1} parent=1 // pred_check_branch
      %93 = sbr.rel (0) target = $region45
    $region44: #{net_forward.1} parent=1 // pred_region
      %95 = dma.done [#allocation8], 2048
    $region45: #{net_forward.1} parent=1 // pred_fallthru
      _
    // Predicated region
    $region46: #{net_forward.1} parent=1 // pred_check
      _
    $region47: #{net_forward.1} parent=1 // pred_check_branch
      %97 = sbr.rel (0) target = $region49
    $region48: #{net_forward.1} parent=1 // pred_region
      %99 = dma.done [#allocation8], 1024
    $region49: #{net_forward.1} parent=1 // pred_fallthru
      _
    %v101 = vld [vmem:[#allocation2] sm:$0xff]
    %v102 = vld [vmem:[#allocation2 + $0x8] sm:$0xff]
    %v103 = vpack.c.bf16 %v101, %v101
    %v104 = vpack.c.bf16 %v102, %v102
    %v105 = vld [vmem:[#allocation4] sm:$0xff]
    %v106 = vld [vmem:[#allocation4 + $0x8] sm:$0xff]
    %v107 = vld [vmem:[#allocation4 + $0x10] sm:$0xff]
    %v108 = vld [vmem:[#allocation4 + $0x18] sm:$0xff]
    %v109 = vld [vmem:[#allocation4 + $0x20] sm:$0xff]
    %v110 = vld [vmem:[#allocation4 + $0x28] sm:$0xff]
    %v111 = vld [vmem:[#allocation4 + $0x30] sm:$0xff]
    %v112 = vld [vmem:[#allocation4 + $0x38] sm:$0xff]
    %v113 = vld [vmem:[#allocation4 + $0x40] sm:$0xff]
    %v114 = vld [vmem:[#allocation4 + $0x48] sm:$0xff]
    %v115 = vld [vmem:[#allocation4 + $0x50] sm:$0xff]
    %v116 = vld [vmem:[#allocation4 + $0x58] sm:$0xff]
    %v117 = vld [vmem:[#allocation4 + $0x60] sm:$0xff]
    %v118 = vld [vmem:[#allocation4 + $0x68] sm:$0xff]
    %v119 = vld [vmem:[#allocation4 + $0x70] sm:$0xff]
    %v120 = vld [vmem:[#allocation4 + $0x78] sm:$0xff]
    %v121 = vld [vmem:[#allocation4 + $0x80] sm:$0xff]
    %v122 = vld [vmem:[#allocation4 + $0x88] sm:$0xff]
    %v123 = vld [vmem:[#allocation4 + $0x90] sm:$0x77]
    %v124 = vld [vmem:[#allocation6] sm:$0x3]
    %v126 = vperm.slane %v124, 0
    %v127 = vperm.slane %v124, 1
    %v149 = vunpack.c.l.b16 %v105
    %v150 = vunpack.c.h.b16 %v105
    %v151 = vunpack.c.l.b16 %v106
    %v152 = vunpack.c.h.b16 %v106
    %v153 = vunpack.c.l.b16 %v107
    %v154 = vunpack.c.h.b16 %v107
    %v155 = vunpack.c.l.b16 %v108
    %v156 = vunpack.c.h.b16 %v108
    %v157 = vunpack.c.l.b16 %v109
    %v158 = vunpack.c.h.b16 %v109
    %v159 = vunpack.c.l.b16 %v110
    %v160 = vunpack.c.h.b16 %v110
    %v161 = vunpack.c.l.b16 %v111
    %v162 = vunpack.c.h.b16 %v111
    %v163 = vunpack.c.l.b16 %v112
    %v164 = vunpack.c.h.b16 %v112
    %v165 = vunpack.c.l.b16 %v113
    %v166 = vunpack.c.h.b16 %v113
    %v167 = vunpack.c.l.b16 %v114
    %v168 = vunpack.c.h.b16 %v114
    %v169 = vunpack.c.l.b16 %v115
    %v170 = vunpack.c.h.b16 %v115
    %v171 = vunpack.c.l.b16 %v116
    %v172 = vunpack.c.h.b16 %v116
    %v173 = vunpack.c.l.b16 %v117
    %v174 = vunpack.c.h.b16 %v117
    %v175 = vunpack.c.l.b16 %v118
    %v176 = vunpack.c.h.b16 %v118
    %v177 = vunpack.c.l.b16 %v119
    %v178 = vunpack.c.h.b16 %v119
    %v179 = vunpack.c.l.b16 %v120
    %v180 = vunpack.c.h.b16 %v120
    %v181 = vunpack.c.l.b16 %v121
    %v182 = vunpack.c.h.b16 %v121
    %v183 = vunpack.c.l.b16 %v122
    %v184 = vunpack.c.h.b16 %v122
    %v185 = vunpack.c.l.b16 %v123
    %v186 = vunpack.c.h.b16 %v123
    %v187 = vpack.c.b16 %v151, %v149
    %v188 = vpack.c.b16 %v152, %v150
    %v189 = vpack.c.b16 %v155, %v153
    %v190 = vpack.c.b16 %v156, %v154
    %v191 = vpack.c.b16 %v159, %v157
    %v192 = vpack.c.b16 %v160, %v158
    %v193 = vpack.c.b16 %v163, %v161
    %v194 = vpack.c.b16 %v164, %v162
    %v195 = vpack.c.b16 %v167, %v165
    %v196 = vpack.c.b16 %v168, %v166
    %v197 = vpack.c.b16 %v171, %v169
    %v198 = vpack.c.b16 %v172, %v170
    %v199 = vpack.c.b16 %v175, %v173
    %v200 = vpack.c.b16 %v176, %v174
    %v201 = vpack.c.b16 %v179, %v177
    %v202 = vpack.c.b16 %v180, %v178
    %v203 = vpack.c.b16 %v183, %v181
    %v204 = vpack.c.b16 %v184, %v182
    %v205 = vpack.c.b16 %v185, %v185
    %v206 = vpack.c.b16 %v186, %v186
    %vm225 = vcmask 179200
    %v227 = vsel %vm225, %v104, 0
    %vm229 = vcmask 1042432
    %v231 = vsel %vm229, %v205, 0
    %v234 = vsel %vm229, %v206, 0
    %236 = vmatpush.bf16.msra.mxu0 %v201
    %237 = vmatpush.bf16.msra.mxu0 %v199
    %238 = vmatpush.bf16.msra.mxu0 %v197
    %239 = vmatpush.bf16.msra.mxu0 %v195
    %240 = vmatpush.bf16.msra.mxu0 %v193
    %241 = vmatpush.bf16.msra.mxu0 %v191
    %242 = vmatpush.bf16.msra.mxu0 %v189
    %243 = vmatpush.bf16.msra.mxu0 %v187
    %244 = vmatmul.bf16.gmra.mxu0 %v103
    %v245 = vpop.f32.mrf.mxu0
    %v246 = vadd.f32 %v126, %v245
    %v247 = vpop.f32.mrf.mxu0
    %248 = vdwg.mxu0
    %249 = vmatpush.bf16.msra.mxu0 0
    %250 = vmatpush.bf16.msra.mxu0 0
    %251 = vmatpush.bf16.msra.mxu0 0
    %252 = vmatpush.bf16.msra.mxu0 0
    %253 = vmatpush.bf16.msra.mxu0 0
    %254 = vmatpush.bf16.msra.mxu0 0
    %255 = vmatpush.bf16.msra.mxu0 %v231
    %256 = vmatpush.bf16.msra.mxu0 %v203
    %257 = vmatmul.bf16.gmra.mxu0 %v227
    %v258 = vpop.f32.mrf.mxu0
    %v259 = vadd.f32 %v246, %v258
    %v260 = vpop.f32.mrf.mxu0
    %261 = vdwg.mxu0
    %262 = vmatpush.bf16.msra.mxu0 %v202
    %263 = vmatpush.bf16.msra.mxu0 %v200
    %264 = vmatpush.bf16.msra.mxu0 %v198
    %265 = vmatpush.bf16.msra.mxu0 %v196
    %266 = vmatpush.bf16.msra.mxu0 %v194
    %267 = vmatpush.bf16.msra.mxu0 %v192
    %268 = vmatpush.bf16.msra.mxu0 %v190
    %269 = vmatpush.bf16.msra.mxu0 %v188
    %270 = vmatmul.bf16.gmra.mxu0 %v103
    %v271 = vpop.f32.mrf.mxu0
    %v272 = vadd.f32 %v127, %v271
    %v273 = vpop.f32.mrf.mxu0
    %274 = vdwg.mxu0
    %275 = vmatpush.bf16.msra.mxu0 0
    %276 = vmatpush.bf16.msra.mxu0 0
    %277 = vmatpush.bf16.msra.mxu0 0
    %278 = vmatpush.bf16.msra.mxu0 0
    %279 = vmatpush.bf16.msra.mxu0 0
    %280 = vmatpush.bf16.msra.mxu0 0
    %281 = vmatpush.bf16.msra.mxu0 %v234
    %282 = vmatpush.bf16.msra.mxu0 %v204
    %283 = vmatmul.bf16.gmra.mxu0 %v227
    %v284 = vpop.f32.mrf.mxu0
    %v285 = vadd.f32 %v272, %v284
    %v286 = vpop.f32.mrf.mxu0
    %287 = vdwg.mxu0
    %v288 = vmax.f32 %v259, 0.0
    %v289 = vmax.f32 %v285, 0.0
    %v290 = vpack.c.bf16 %v288, %v288
    %v291 = vpack.c.bf16 %v289, %v289
    %v292 = vld [vmem:[#allocation7] sm:$0xf]
    %v293 = vld [vmem:[#allocation7 + $0x4] sm:$0xf]
    %v294 = vld [vmem:[#allocation7 + $0x8] sm:$0xf]
    %v295 = vld [vmem:[#allocation7 + $0xc] sm:$0xf]
    %v296 = vld [vmem:[#allocation7 + $0x10] sm:$0xf]
    %v297 = vld [vmem:[#allocation7 + $0x14] sm:$0xf]
    %v298 = vld [vmem:[#allocation7 + $0x18] sm:$0xf]
    %v299 = vld [vmem:[#allocation7 + $0x1c] sm:$0xf]
    %v300 = vld [vmem:[#allocation7 + $0x20] sm:$0xf]
    %v301 = vld [vmem:[#allocation7 + $0x24] sm:$0xf]
    %v302 = vld [vmem:[#allocation7 + $0x28] sm:$0xf]
    %v303 = vld [vmem:[#allocation7 + $0x2c] sm:$0xf]
    %v304 = vld [vmem:[#allocation7 + $0x30] sm:$0xf]
    %v305 = vld [vmem:[#allocation7 + $0x34] sm:$0xf]
    %v306 = vld [vmem:[#allocation7 + $0x38] sm:$0xf]
    %v307 = vld [vmem:[#allocation7 + $0x3c] sm:$0xf]
    %v308 = vld [vmem:[#allocation7 + $0x40] sm:$0xf]
    %v309 = vld [vmem:[#allocation7 + $0x44] sm:$0xf]
    %v310 = vld [vmem:[#allocation7 + $0x48] sm:$0xf]
    %v311 = vld [vmem:[#allocation7 + $0x4c] sm:$0xf]
    %v312 = vld [vmem:[#allocation7 + $0x50] sm:$0xf]
    %v313 = vld [vmem:[#allocation7 + $0x54] sm:$0xf]
    %v314 = vld [vmem:[#allocation7 + $0x58] sm:$0xf]
    %v315 = vld [vmem:[#allocation7 + $0x5c] sm:$0xf]
    %v316 = vld [vmem:[#allocation7 + $0x60] sm:$0xf]
    %v317 = vld [vmem:[#allocation7 + $0x64] sm:$0xf]
    %v318 = vld [vmem:[#allocation7 + $0x68] sm:$0xf]
    %v319 = vld [vmem:[#allocation7 + $0x6c] sm:$0xf]
    %v320 = vld [vmem:[#allocation7 + $0x70] sm:$0xf]
    %v321 = vld [vmem:[#allocation7 + $0x74] sm:$0xf]
    %v322 = vld [vmem:[#allocation7 + $0x78] sm:$0xf]
    %v323 = vld [vmem:[#allocation7 + $0x7c] sm:$0xf]
    %v324 = vld [vmem:[%s4] sm:$0x1]
    %v326 = vperm.slane %v324, 0
    %v360 = vunpack.c.l.b16 %v292
    %v361 = vunpack.c.l.b16 %v293
    %v362 = vunpack.c.l.b16 %v294
    %v363 = vunpack.c.l.b16 %v295
    %v364 = vunpack.c.l.b16 %v296
    %v365 = vunpack.c.l.b16 %v297
    %v366 = vunpack.c.l.b16 %v298
    %v367 = vunpack.c.l.b16 %v299
    %v368 = vunpack.c.l.b16 %v300
    %v369 = vunpack.c.l.b16 %v301
    %v370 = vunpack.c.l.b16 %v302
    %v371 = vunpack.c.l.b16 %v303
    %v372 = vunpack.c.l.b16 %v304
    %v373 = vunpack.c.l.b16 %v305
    %v374 = vunpack.c.l.b16 %v306
    %v375 = vunpack.c.l.b16 %v307
    %v376 = vunpack.c.l.b16 %v308
    %v377 = vunpack.c.l.b16 %v309
    %v378 = vunpack.c.l.b16 %v310
    %v379 = vunpack.c.l.b16 %v311
    %v380 = vunpack.c.l.b16 %v312
    %v381 = vunpack.c.l.b16 %v313
    %v382 = vunpack.c.l.b16 %v314
    %v383 = vunpack.c.l.b16 %v315
    %v384 = vunpack.c.l.b16 %v316
    %v385 = vunpack.c.l.b16 %v317
    %v386 = vunpack.c.l.b16 %v318
    %v387 = vunpack.c.l.b16 %v319
    %v388 = vunpack.c.l.b16 %v320
    %v389 = vunpack.c.l.b16 %v321
    %v390 = vunpack.c.l.b16 %v322
    %v391 = vunpack.c.l.b16 %v323
    %v392 = vpack.c.b16 %v361, %v360
    %v393 = vpack.c.b16 %v363, %v362
    %v394 = vpack.c.b16 %v365, %v364
    %v395 = vpack.c.b16 %v367, %v366
    %v396 = vpack.c.b16 %v369, %v368
    %v397 = vpack.c.b16 %v371, %v370
    %v398 = vpack.c.b16 %v373, %v372
    %v399 = vpack.c.b16 %v375, %v374
    %v400 = vpack.c.b16 %v377, %v376
    %v401 = vpack.c.b16 %v379, %v378
    %v402 = vpack.c.b16 %v381, %v380
    %v403 = vpack.c.b16 %v383, %v382
    %v404 = vpack.c.b16 %v385, %v384
    %v405 = vpack.c.b16 %v387, %v386
    %v406 = vpack.c.b16 %v389, %v388
    %v407 = vpack.c.b16 %v391, %v390
    %424 = vmatpush.bf16.msra.mxu0 %v399
    %425 = vmatpush.bf16.msra.mxu0 %v398
    %426 = vmatpush.bf16.msra.mxu0 %v397
    %427 = vmatpush.bf16.msra.mxu0 %v396
    %428 = vmatpush.bf16.msra.mxu0 %v395
    %429 = vmatpush.bf16.msra.mxu0 %v394
    %430 = vmatpush.bf16.msra.mxu0 %v393
    %431 = vmatpush.bf16.msra.mxu0 %v392
    %432 = vmatmul.bf16.gmra.mxu0 %v290
    %v433 = vpop.f32.mrf.mxu0
    %v434 = vadd.f32 %v326, %v433
    %v435 = vpop.f32.mrf.mxu0
    %436 = vdwg.mxu0
    %437 = vmatpush.bf16.msra.mxu0 %v407
    %438 = vmatpush.bf16.msra.mxu0 %v406
    %439 = vmatpush.bf16.msra.mxu0 %v405
    %440 = vmatpush.bf16.msra.mxu0 %v404
    %441 = vmatpush.bf16.msra.mxu0 %v403
    %442 = vmatpush.bf16.msra.mxu0 %v402
    %443 = vmatpush.bf16.msra.mxu0 %v401
    %444 = vmatpush.bf16.msra.mxu0 %v400
    %445 = vmatmul.bf16.gmra.mxu0 %v291
    %v446 = vpop.f32.mrf.mxu0
    %v447 = vadd.f32 %v434, %v446
    %v448 = vpop.f32.mrf.mxu0
    %449 = vdwg.mxu0
    %v450 = vmax.f32 %v447, 0.0
    %v451 = vpack.c.bf16 %v450, %v450
    %v452 = vld [vmem:[#allocation9] sm:$0xf]
    %v453 = vld [vmem:[#allocation9 + $0x4] sm:$0xf]
    %v454 = vld [vmem:[#allocation9 + $0x8] sm:$0xf]
    %v455 = vld [vmem:[#allocation9 + $0xc] sm:$0xf]
    %v456 = vld [vmem:[#allocation9 + $0x10] sm:$0xf]
    %v457 = vld [vmem:[#allocation9 + $0x14] sm:$0xf]
    %v458 = vld [vmem:[#allocation9 + $0x18] sm:$0xf]
    %v459 = vld [vmem:[#allocation9 + $0x1c] sm:$0xf]
    %v460 = vld [vmem:[#allocation9 + $0x20] sm:$0xf]
    %v461 = vld [vmem:[#allocation9 + $0x24] sm:$0xf]
    %v462 = vld [vmem:[#allocation9 + $0x28] sm:$0xf]
    %v463 = vld [vmem:[#allocation9 + $0x2c] sm:$0xf]
    %v464 = vld [vmem:[#allocation9 + $0x30] sm:$0xf]
    %v465 = vld [vmem:[#allocation9 + $0x34] sm:$0xf]
    %v466 = vld [vmem:[#allocation9 + $0x38] sm:$0xf]
    %v467 = vld [vmem:[#allocation9 + $0x3c] sm:$0xf]
    %v468 = vld [vmem:[%s6] sm:$0x1]
    %v470 = vperm.slane %v468, 0
    %v488 = vunpack.c.l.b16 %v452
    %v489 = vunpack.c.l.b16 %v453
    %v490 = vunpack.c.l.b16 %v454
    %v491 = vunpack.c.l.b16 %v455
    %v492 = vunpack.c.l.b16 %v456
    %v493 = vunpack.c.l.b16 %v457
    %v494 = vunpack.c.l.b16 %v458
    %v495 = vunpack.c.l.b16 %v459
    %v496 = vunpack.c.l.b16 %v460
    %v497 = vunpack.c.l.b16 %v461
    %v498 = vunpack.c.l.b16 %v462
    %v499 = vunpack.c.l.b16 %v463
    %v500 = vunpack.c.l.b16 %v464
    %v501 = vunpack.c.l.b16 %v465
    %v502 = vunpack.c.l.b16 %v466
    %v503 = vunpack.c.l.b16 %v467
    %v504 = vpack.c.b16 %v489, %v488
    %v505 = vpack.c.b16 %v491, %v490
    %v506 = vpack.c.b16 %v493, %v492
    %v507 = vpack.c.b16 %v495, %v494
    %v508 = vpack.c.b16 %v497, %v496
    %v509 = vpack.c.b16 %v499, %v498
    %v510 = vpack.c.b16 %v501, %v500
    %v511 = vpack.c.b16 %v503, %v502
    %520 = vmatpush.bf16.msra.mxu0 %v511
    %521 = vmatpush.bf16.msra.mxu0 %v510
    %522 = vmatpush.bf16.msra.mxu0 %v509
    %523 = vmatpush.bf16.msra.mxu0 %v508
    %524 = vmatpush.bf16.msra.mxu0 %v507
    %525 = vmatpush.bf16.msra.mxu0 %v506
    %526 = vmatpush.bf16.msra.mxu0 %v505
    %527 = vmatpush.bf16.msra.mxu0 %v504
    %528 = vmatmul.bf16.gmra.mxu0 %v451
    %v529 = vpop.f32.mrf.mxu0
    %v530 = vadd.f32 %v470, %v529
    %v531 = vpop.f32.mrf.mxu0
    %532 = vdwg.mxu0
    %v533 = vmax.f32 %v530, 0.0
    %v534 = vpack.c.bf16 %v533, %v533
    %535 = vst [vmem:[%s7] sm:$0xf] %v534
    // Predicated region
    $region50: #{net_forward.1} parent=1 // pred_check
      _
    $region51: #{net_forward.1} parent=1 // pred_check_branch
      %537 = sbr.rel (0) target = $region53
    $region52: #{net_forward.1} parent=1 // pred_region
      _
    $region53: #{net_forward.1} parent=1 // pred_fallthru
      _
    // Predicated region
    $region54: #{net_forward.1} parent=1 // pred_check
      _
    $region55: #{net_forward.1} parent=1 // pred_check_branch
      %539 = sbr.rel (0) target = $region57
    $region56: #{net_forward.1} parent=1 // pred_region
      _
    $region57: #{net_forward.1} parent=1 // pred_fallthru
      _
    %540 = vsyncpa [#allocation3], 1
    %541 = vsyncpa [#allocation5], 1
    %542 = vsyncpa [#allocation8], 1

</llo_original>
